<compile_context>
chip_gen: v5e
topology: v5e:2x2
jax: 0.10.0
libtpu: 0.0.40
codegen_flags: <defaults>
</compile_context>

<pallas_src>
import functools
import math

import jax
import jax.numpy as jnp
from jax.experimental import pallas as pl
from jax.experimental.pallas import tpu as pltpu

PAD = 0          # Constants.PAD in the reference codebase
LN_EPS = 1e-5    # nn.LayerNorm default
NEG_INF = -1e9   # additive attention-mask value


# ---------------------------------------------------------------------------
# tile sizing / compiler params
# ---------------------------------------------------------------------------
def _round_up(n, m):
    return ((n + m - 1) // m) * m


def _tpu_vmem_bytes():
    try:
        return int(pltpu.get_tpu_info().vmem_capacity_bytes)
    except Exception:
        return 64 * 1024 * 1024   # conservative default (v7x physical VMEM)


def _num_tensorcores():
    try:
        info = pltpu.get_tpu_info()
        for attr in ("num_cores", "core_count", "num_tensorcores"):
            if hasattr(info, attr):
                return max(1, int(getattr(info, attr)))
    except Exception:
        pass
    return 1


def _vmem_limit_bytes():
    # Raise the scoped-VMEM cap (default 32 MiB) but leave headroom on v7x.
    return int(min(_tpu_vmem_bytes() * 3 // 4, 96 * 1024 * 1024))


def _choose_row_tile(rows, stream_bytes_per_row, resident_bytes=0):
    """Largest row tile fitting the scoped-VMEM budget minus resident blocks."""
    budget = _vmem_limit_bytes()
    avail = budget - 2 * int(resident_bytes)          # constant blocks (2 bufs)
    avail = max(avail, budget // 8)
    tile = avail // (2 * max(int(stream_bytes_per_row), 1))   # double-buffered
    tile = max(8, (tile // 8) * 8)
    tile = min(tile, 2048)
    if rows >= 8:
        tile = min(tile, (rows // 8) * 8)
    else:
        tile = 8
    # Only split for multiple TensorCores, and only when each half keeps the
    # MXU M-dimension >= 256 rows.
    if _num_tensorcores() > 1 and rows >= 512:
        tile = min(tile, _round_up(pl.cdiv(rows, 2), 8))
    return tile


def _compiler_params(n_axes):
    return pltpu.CompilerParams(
        dimension_semantics=("parallel",) * n_axes,
        vmem_limit_bytes=_vmem_limit_bytes(),
    )


# ---------------------------------------------------------------------------
# shared in-kernel helpers
# ---------------------------------------------------------------------------
def _ln_rows(v, params_f32):
    """Two-pass LayerNorm over the last dim of a (rows, D) f32 tile."""
    mean = jnp.mean(v, axis=-1, keepdims=True)
    c = v - mean
    var = jnp.mean(c * c, axis=-1, keepdims=True)
    scale = jax.lax.rsqrt(var + LN_EPS) * params_f32[0:1, :]   # rsqrt*gamma
    return c * scale + params_f32[1:2, :]


# ---------------------------------------------------------------------------
# standalone LayerNorm (decoder-level LN only: emb LN in post-LN layout,
# final LN in pre-LN layout)
# ---------------------------------------------------------------------------
def _ln_kernel(x_ref, p_ref, o_ref):
    x = x_ref[...].astype(jnp.float32)
    o_ref[...] = _ln_rows(x, p_ref[...].astype(jnp.float32)).astype(o_ref.dtype)


def layer_norm(x, ln_params):
    shp = x.shape
    d = shp[-1]
    x2 = x.reshape(-1, d)
    rows = x2.shape[0]
    isz = x2.dtype.itemsize
    tile = _choose_row_tile(rows, 2 * d * isz, ln_params.size * 4)
    out = pl.pallas_call(
        _ln_kernel,
        out_shape=jax.ShapeDtypeStruct((rows, d), x.dtype),
        grid=(pl.cdiv(rows, tile),),
        in_specs=[pl.BlockSpec((tile, d), lambda i: (i, 0)),
                  pl.BlockSpec((2, d), lambda i: (0, 0))],
        out_specs=pl.BlockSpec((tile, d), lambda i: (i, 0)),
        compiler_params=_compiler_params(1),
    )(x2, ln_params)
    return out.reshape(shp)


# ---------------------------------------------------------------------------
# fused [pre-LN] + projection kernel (Q / QKV / KV), lane-dense split outputs
# ---------------------------------------------------------------------------
def _proj_kernel(*refs, apply_ln, n_out):
    if apply_ln:
        x_ref, ln_ref, w_ref, b_ref = refs[:4]
    else:
        x_ref, w_ref, b_ref = refs[:3]
        ln_ref = None
    o_refs = refs[-n_out:]
    x = x_ref[...]
    if apply_ln:
        x = _ln_rows(x.astype(jnp.float32),
                     ln_ref[...].astype(jnp.float32)).astype(x_ref.dtype)
    acc = jnp.dot(x, w_ref[...], preferred_element_type=jnp.float32)
    acc = acc + b_ref[...].astype(jnp.float32)
    d = acc.shape[-1] // n_out
    for i in range(n_out):
        o_refs[i][...] = acc[:, i * d:(i + 1) * d].astype(o_refs[i].dtype)


def fused_projection(x2, wt, b, ln_params=None, n_out=1):
    """x2: (rows, din); wt: (din, dout_total) pre-transposed; b: (1, dout_total)."""
    rows, din = x2.shape
    dout_total = wt.shape[1]
    dsplit = dout_total // n_out
    isz = x2.dtype.itemsize
    apply_ln = ln_params is not None
    resident = (wt.size + b.size) * wt.dtype.itemsize
    if apply_ln:
        resident += ln_params.size * ln_params.dtype.itemsize
    tile = _choose_row_tile(rows, (din + 2 * dout_total) * 4, resident)

    in_specs = [pl.BlockSpec((tile, din), lambda i: (i, 0))]
    args = [x2]
    if apply_ln:
        in_specs.append(pl.BlockSpec((2, din), lambda i: (0, 0)))
        args.append(ln_params)
    in_specs += [pl.BlockSpec((din, dout_total), lambda i: (0, 0)),
                 pl.BlockSpec((1, dout_total), lambda i: (0, 0))]
    args += [wt, b]

    if n_out == 1:
        out_shape = jax.ShapeDtypeStruct((rows, dsplit), x2.dtype)
        out_specs = pl.BlockSpec((tile, dsplit), lambda i: (i, 0))
    else:
        out_shape = tuple(jax.ShapeDtypeStruct((rows, dsplit), x2.dtype)
                          for _ in range(n_out))
        out_specs = tuple(pl.BlockSpec((tile, dsplit), lambda i: (i, 0))
                          for _ in range(n_out))

    cost = pl.CostEstimate(
        flops=int(2 * rows * din * dout_total),
        transcendentals=0,
        bytes_accessed=int((x2.size + wt.size + b.size + rows * dout_total) * isz))

    return pl.pallas_call(
        functools.partial(_proj_kernel, apply_ln=apply_ln, n_out=n_out),
        out_shape=out_shape,
        grid=(pl.cdiv(rows, tile),),
        in_specs=in_specs,
        out_specs=out_specs,
        compiler_params=_compiler_params(1),
        cost_estimate=cost,
    )(*args)


# ---------------------------------------------------------------------------
# output projection + residual (+ post-LN) kernel
# ---------------------------------------------------------------------------
def _out_proj_kernel(*refs, apply_post_ln):
    if apply_post_ln:
        ctx_ref, res_ref, ln_ref, w_ref, b_ref, o_ref = refs
    else:
        ctx_ref, res_ref, w_ref, b_ref, o_ref = refs
        ln_ref = None
    y = jnp.dot(ctx_ref[...], w_ref[...], preferred_element_type=jnp.float32)
    y = y + b_ref[...].astype(jnp.float32) + res_ref[...].astype(jnp.float32)
    if apply_post_ln:
        y = _ln_rows(y, ln_ref[...].astype(jnp.float32))
    o_ref[...] = y.astype(o_ref.dtype)


def output_projection_residual(ctx2, res2, wt, b, ln_params=None):
    rows, din = ctx2.shape
    dout = wt.shape[1]
    isz = ctx2.dtype.itemsize
    apply_post_ln = ln_params is not None
    resident = (wt.size + b.size) * wt.dtype.itemsize
    if apply_post_ln:
        resident += ln_params.size * ln_params.dtype.itemsize
    tile = _choose_row_tile(rows, (2 * din + 2 * dout) * 4, resident)

    in_specs = [pl.BlockSpec((tile, din), lambda i: (i, 0)),
                pl.BlockSpec((tile, din), lambda i: (i, 0))]
    args = [ctx2, res2]
    if apply_post_ln:
        in_specs.append(pl.BlockSpec((2, dout), lambda i: (0, 0)))
        args.append(ln_params)
    in_specs += [pl.BlockSpec((din, dout), lambda i: (0, 0)),
                 pl.BlockSpec((1, dout), lambda i: (0, 0))]
    args += [wt, b]

    cost = pl.CostEstimate(
        flops=int(2 * rows * din * dout),
        transcendentals=0,
        bytes_accessed=int((2 * ctx2.size + wt.size + b.size + rows * dout) * isz))

    return pl.pallas_call(
        functools.partial(_out_proj_kernel, apply_post_ln=apply_post_ln),
        out_shape=jax.ShapeDtypeStruct((rows, dout), ctx2.dtype),
        grid=(pl.cdiv(rows, tile),),
        in_specs=in_specs,
        out_specs=pl.BlockSpec((tile, dout), lambda i: (i, 0)),
        compiler_params=_compiler_params(1),
        cost_estimate=cost,
    )(*args)


# ---------------------------------------------------------------------------
# fused FFN block: [pre-LN] -> w1 -> ReLU -> w2 -> +residual -> [post-LN]
# ---------------------------------------------------------------------------
def _ffn_kernel(*refs, apply_pre_ln, apply_post_ln):
    x_ref, ln_ref, w1_ref, b1_ref, w2_ref, b2_ref, o_ref = refs
    res = x_ref[...].astype(jnp.float32)
    ln_p = ln_ref[...].astype(jnp.float32)
    if apply_pre_ln:
        t = _ln_rows(res, ln_p).astype(x_ref.dtype)
    else:
        t = x_ref[...]
    h = jnp.dot(t, w1_ref[...], preferred_element_type=jnp.float32)
    h = jnp.maximum(h + b1_ref[...].astype(jnp.float32), 0.0)        # ReLU
    y = jnp.dot(h.astype(w2_ref.dtype), w2_ref[...],
                preferred_element_type=jnp.float32)
    y = y + b2_ref[...].astype(jnp.float32) + res
    if apply_post_ln:
        y = _ln_rows(y, ln_p)
    o_ref[...] = y.astype(o_ref.dtype)


def feed_forward_block(x2, ffn_p, ln_params, layer_norm_first):
    """PositionwiseFeedForwardBlock forward (eval) fused in one kernel."""
    # TODO(synk): 'gelu' FFN activation is not implemented; default 'relu' used.
    rows, d = x2.shape
    hd = ffn_p["w1"].shape[1]
    isz = x2.dtype.itemsize
    resident = ((ffn_p["w1"].size + ffn_p["w2"].size + ffn_p["b1"].size
                 + ffn_p["b2"].size) * ffn_p["w1"].dtype.itemsize
                + ln_params.size * ln_params.dtype.itemsize)
    tile = _choose_row_tile(rows, (2 * d + 2 * hd) * 4, resident)

    cost = pl.CostEstimate(
        flops=int(4 * rows * d * hd),
        transcendentals=0,
        bytes_accessed=int((2 * x2.size + ffn_p["w1"].size + ffn_p["w2"].size) * isz))

    return pl.pallas_call(
        functools.partial(_ffn_kernel,
                          apply_pre_ln=layer_norm_first,
                          apply_post_ln=not layer_norm_first),
        out_shape=jax.ShapeDtypeStruct((rows, d), x2.dtype),
        grid=(pl.cdiv(rows, tile),),
        in_specs=[pl.BlockSpec((tile, d), lambda i: (i, 0)),
                  pl.BlockSpec((2, d), lambda i: (0, 0)),
                  pl.BlockSpec((d, hd), lambda i: (0, 0)),
                  pl.BlockSpec((1, hd), lambda i: (0, 0)),
                  pl.BlockSpec((hd, d), lambda i: (0, 0)),
                  pl.BlockSpec((1, d), lambda i: (0, 0))],
        out_specs=pl.BlockSpec((tile, d), lambda i: (i, 0)),
        compiler_params=_compiler_params(1),
        cost_estimate=cost,
    )(x2, ln_params, ffn_p["w1"], ffn_p["b1"], ffn_p["w2"], ffn_p["b2"])


# ---------------------------------------------------------------------------
# lane-dense per-batch attention kernel: all heads handled in-kernel,
# causal mask built from iota, only a (1, Lk) key bias streamed.
# ---------------------------------------------------------------------------
def _attn_kernel(q_ref, k_ref, v_ref, kbias_ref, o_ref, *, scale, n_head, causal):
    q = q_ref[...]                                   # (Lq, D)
    k = k_ref[...]                                   # (Lk, D)
    v = v_ref[...]                                   # (Lk, D)
    lq, d = q.shape
    lk = k.shape[0]
    dh = d // n_head
    bias = kbias_ref[...].astype(jnp.float32)        # (1, Lk)
    if causal:
        qi = jax.lax.broadcasted_iota(jnp.int32, (lq, lk), 0)
        ki = jax.lax.broadcasted_iota(jnp.int32, (lq, lk), 1)
        bias = bias + jnp.where(ki > qi, NEG_INF, 0.0).astype(jnp.float32)
    outs = []
    for h in range(n_head):                          # static, unrolled
        qh = q[:, h * dh:(h + 1) * dh]
        kh = k[:, h * dh:(h + 1) * dh]
        vh = v[:, h * dh:(h + 1) * dh]
        s = jax.lax.dot_general(qh, kh, (((1,), (1,)), ((), ())),
                                preferred_element_type=jnp.float32)
        s = s * scale + bias
        m = jnp.max(s, axis=-1, keepdims=True)
        p = jnp.exp(s - m)
        denom = jnp.sum(p, axis=-1, keepdims=True)
        oh = jnp.dot(p.astype(vh.dtype), vh, preferred_element_type=jnp.float32)
        outs.append(oh * pl.reciprocal(denom, approx=True))
    o_ref[...] = jnp.concatenate(outs, axis=-1).astype(o_ref.dtype)


def attention(q, k, v, key_bias, *, n_head, causal):
    """q: (B, Lq, D); k, v: (B, Lk, D); key_bias: (B, 1, Lk) additive."""
    B, Lq, D = q.shape
    Lk = k.shape[1]
    scale = 1.0 / math.sqrt(D // n_head)
    isz = q.dtype.itemsize
    cost = pl.CostEstimate(
        flops=int(4 * B * Lq * Lk * D),
        transcendentals=int(B * n_head * Lq * Lk),
        bytes_accessed=int((2 * q.size + k.size + v.size) * isz + key_bias.size * 4))
    return pl.pallas_call(
        functools.partial(_attn_kernel, scale=scale, n_head=n_head, causal=causal),
        out_shape=jax.ShapeDtypeStruct((B, Lq, D), q.dtype),
        grid=(B,),
        in_specs=[pl.BlockSpec((None, Lq, D), lambda b: (b, 0, 0)),
                  pl.BlockSpec((None, Lk, D), lambda b: (b, 0, 0)),
                  pl.BlockSpec((None, Lk, D), lambda b: (b, 0, 0)),
                  pl.BlockSpec((None, 1, Lk), lambda b: (b, 0, 0))],
        out_specs=pl.BlockSpec((None, Lq, D), lambda b: (b, 0, 0)),
        compiler_params=_compiler_params(1),
        cost_estimate=cost,
    )(q, k, v, key_bias)


# ---------------------------------------------------------------------------
# DecoderLayer / Decoder (eval forward) — 8 pallas_calls per layer
# ---------------------------------------------------------------------------
def decoder_layer(x, enc_output, slf_kbias, ctx_kbias, lp, layer_norm_first):
    B, L, D = x.shape
    S = enc_output.shape[1]
    x2 = x.reshape(B * L, D)

    # --- self-attention block (fused QKV proj, fused out-proj + residual) ---
    slf = lp["slf"]
    q, k, v = fused_projection(
        x2, slf["wqkv"], slf["bqkv"],
        ln_params=lp["ln_slf"] if layer_norm_first else None, n_out=3)
    ctx_vec = attention(q.reshape(B, L, D), k.reshape(B, L, D), v.reshape(B, L, D),
                        slf_kbias, n_head=slf["n_head"], causal=True)
    x2 = output_projection_residual(
        ctx_vec.reshape(B * L, D), x2, slf["wo"], slf["bo"],
        ln_params=None if layer_norm_first else lp["ln_slf"])

    # --- encoder (cross) attention block ---
    cp = lp["ctx"]
    q = fused_projection(
        x2, cp["wq"], cp["bq"],
        ln_params=lp["ln_ctx"] if layer_norm_first else None, n_out=1)
    k, v = fused_projection(enc_output.reshape(B * S, D), cp["wkv"], cp["bkv"],
                            ln_params=None, n_out=2)
    ctx_vec = attention(q.reshape(B, L, D), k.reshape(B, S, D), v.reshape(B, S, D),
                        ctx_kbias, n_head=cp["n_head"], causal=False)
    x2 = output_projection_residual(
        ctx_vec.reshape(B * L, D), x2, cp["wo"], cp["bo"],
        ln_params=None if layer_norm_first else lp["ln_ctx"])

    # --- position-wise feed-forward block (fully fused) ---
    x2 = feed_forward_block(x2, lp["ffn"], lp["ln_ffn"], layer_norm_first)
    return x2.reshape(B, L, D)


def _sinusoid_position_encoding(length, dim):
    pos = jnp.arange(length, dtype=jnp.float32)[:, None]
    i = jnp.arange(dim, dtype=jnp.float32)[None, :]
    angle = pos / jnp.power(10000.0, 2.0 * jnp.floor(i / 2.0) / dim)
    even = (jnp.arange(dim) % 2)[None, :] == 0
    return jnp.where(even, jnp.sin(angle), jnp.cos(angle)).astype(jnp.float32)


def _embed_and_masks(tgt_seq, enc_output, enc_mask, params):
    """Shared by the Pallas path and the pure-JAX reference."""
    B, L = tgt_seq.shape
    D = params["d_model"]
    S = enc_output.shape[1]
    # TODO(synk): Embeddings class is external to the spec; standard scaled
    #             embedding + sinusoidal positions (eval, no dropout) assumed;
    #             the table gather is a plain jnp.take (no Pallas gather).
    emb = jnp.take(params["embed"], tgt_seq, axis=0) * math.sqrt(D)
    emb = (emb + _sinusoid_position_encoding(L, D)[None]).astype(enc_output.dtype)
    # Per-key additive biases only; the causal part is generated in-kernel.
    slf_kbias = jnp.where((tgt_seq == PAD)[:, None, :], NEG_INF, 0.0).astype(jnp.float32)
    ctx_kbias = jnp.where(enc_mask[:, None, :], NEG_INF, 0.0).astype(jnp.float32)
    return emb, slf_kbias, ctx_kbias


def decoder_forward(tgt_seq, enc_output, enc_mask, prepared, layer_norm_first=True):
    """Pallas forward of Decoder (eval mode, full-sequence, no caches)."""
    emb, slf_kbias, ctx_kbias = _embed_and_masks(tgt_seq, enc_output, enc_mask, prepared)
    x = emb if layer_norm_first else layer_norm(emb, prepared["ln_final"])
    for lp in prepared["layers"]:
        x = decoder_layer(x, enc_output, slf_kbias, ctx_kbias, lp, layer_norm_first)
    if layer_norm_first:
        x = layer_norm(x, prepared["ln_final"])
    # TODO(synk): incremental-decoding self/enc attention caches and the
    #             per-layer attention weights are not returned.
    return x


# ---------------------------------------------------------------------------
# parameters (PyTorch layout) + one-time device-layout preparation
# ---------------------------------------------------------------------------
def init_params(key, *, vocab, d_model, d_inner, n_head, n_layers):
    k_embed, k_final, k_layers = jax.random.split(key, 3)

    def dense(k, dout, din):
        kw, kb = jax.random.split(k)
        w = 0.05 * jax.random.normal(kw, (dout, din), jnp.float32)  # (out, in)
        b = 0.02 * jax.random.normal(kb, (dout,), jnp.float32)
        return w, b

    def ln_params(k):
        kg, kb = jax.random.split(k)
        gamma = 1.0 + 0.1 * jax.random.normal(kg, (d_model,), jnp.float32)
        beta = 0.05 * jax.random.normal(kb, (d_model,), jnp.float32)
        return jnp.stack([gamma, beta])          # (2, D) resident parameter block

    def mha_params(k):
        kq, kk, kv, ko = jax.random.split(k, 4)
        wq, bq = dense(kq, d_model, d_model)
        wk, bk = dense(kk, d_model, d_model)
        wv, bv = dense(kv, d_model, d_model)
        wo, bo = dense(ko, d_model, d_model)
        return dict(n_head=n_head, wq=wq, bq=bq, wk=wk, bk=bk,
                    wv=wv, bv=bv, wo=wo, bo=bo)

    embed = 0.1 * jax.random.normal(k_embed, (vocab, d_model), jnp.float32)
    embed = embed.at[PAD].set(0.0)               # padding_idx row

    layers = []
    for li in range(n_layers):
        kl = jax.random.fold_in(k_layers, li)
        k1, k2, k3, k4, k5, k6, k7 = jax.random.split(kl, 7)
        w1, b1 = dense(k6, d_inner, d_model)
        w2, b2 = dense(k7, d_model, d_inner)
        layers.append(dict(ln_slf=ln_params(k1), slf=mha_params(k2),
                           ln_ctx=ln_params(k3), ctx=mha_params(k4),
                           ln_ffn=ln_params(k5),
                           ffn=dict(w1=w1, b1=b1, w2=w2, b2=b2)))

    return dict(d_model=d_model, embed=embed, layers=layers,
                ln_final=ln_params(k_final))


def prepare_params(params):
    """One-time weight transpose / QKV-KV concat for the Pallas kernels."""
    prepared_layers = []
    for lp in params["layers"]:
        s, c, f = lp["slf"], lp["ctx"], lp["ffn"]
        prepared_layers.append(dict(
            ln_slf=lp["ln_slf"], ln_ctx=lp["ln_ctx"], ln_ffn=lp["ln_ffn"],
            slf=dict(
                n_head=s["n_head"],
                wqkv=jnp.concatenate([s["wq"].T, s["wk"].T, s["wv"].T], axis=1),
                bqkv=jnp.concatenate([s["bq"], s["bk"], s["bv"]]).reshape(1, -1),
                wo=s["wo"].T, bo=s["bo"].reshape(1, -1)),
            ctx=dict(
                n_head=c["n_head"],
                wq=c["wq"].T, bq=c["bq"].reshape(1, -1),
                wkv=jnp.concatenate([c["wk"].T, c["wv"].T], axis=1),
                bkv=jnp.concatenate([c["bk"], c["bv"]]).reshape(1, -1),
                wo=c["wo"].T, bo=c["bo"].reshape(1, -1)),
            ffn=dict(w1=f["w1"].T, b1=f["b1"].reshape(1, -1),
                     w2=f["w2"].T, b2=f["b2"].reshape(1, -1)),
        ))
    return dict(d_model=params["d_model"], embed=params["embed"],
                layers=prepared_layers, ln_final=params["ln_final"])


# ---------------------------------------------------------------------------
# pure-JAX reference (for the correctness assert)
# ---------------------------------------------------------------------------
def _ref_layer_norm(x, ln_params):
    gamma, beta = ln_params[0], ln_params[1]
    mean = jnp.mean(x, axis=-1, keepdims=True)
    var = jnp.mean(jnp.square(x - mean), axis=-1, keepdims=True)
    return (x - mean) * jax.lax.rsqrt(var + LN_EPS) * gamma + beta


def _ref_linear(x, w, b):
    return x @ w.T + b


def _ref_mha(key_x, value_x, query_x, key_bias, causal, p):
    B, Lq, D = query_x.shape
    Lk = key_x.shape[1]
    H = p["n_head"]
    Dh = D // H
    q = _ref_linear(query_x, p["wq"], p["bq"]).reshape(B, Lq, H, Dh).transpose(0, 2, 1, 3)
    k = _ref_linear(key_x, p["wk"], p["bk"]).reshape(B, Lk, H, Dh).transpose(0, 2, 1, 3)
    v = _ref_linear(value_x, p["wv"], p["bv"]).reshape(B, Lk, H, Dh).transpose(0, 2, 1, 3)
    s = jnp.einsum("bhqd,bhkd->bhqk", q, k) / math.sqrt(Dh)
    s = s + key_bias[:, None, :, :]                       # (B,1,1,Lk)
    if causal:
        cb = jnp.where(jnp.triu(jnp.ones((Lq, Lk), dtype=bool), k=1), NEG_INF, 0.0)
        s = s + cb[None, None]
    a = jax.nn.softmax(s, axis=-1)
    ctx = jnp.einsum("bhqk,bhkd->bhqd", a, v).transpose(0, 2, 1, 3).reshape(B, Lq, D)
    return _ref_linear(ctx, p["wo"], p["bo"])


def _ref_ffn(x, p):
    h = jnp.maximum(_ref_linear(x, p["w1"], p["b1"]), 0.0)
    return _ref_linear(h, p["w2"], p["b2"])


def reference_decoder(tgt_seq, enc_output, enc_mask, params, layer_norm_first=True):
    emb, slf_kbias, ctx_kbias = _embed_and_masks(tgt_seq, enc_output, enc_mask, params)
    x = emb if layer_norm_first else _ref_layer_norm(emb, params["ln_final"])
    for lp in params["layers"]:
        t = _ref_layer_norm(x, lp["ln_slf"]) if layer_norm_first else x
        x = x + _ref_mha(t, t, t, slf_kbias, True, lp["slf"])
        if not layer_norm_first:
            x = _ref_layer_norm(x, lp["ln_slf"])
        t = _ref_layer_norm(x, lp["ln_ctx"]) if layer_norm_first else x
        x = x + _ref_mha(enc_output, enc_output, t, ctx_kbias, False, lp["ctx"])
        if not layer_norm_first:
            x = _ref_layer_norm(x, lp["ln_ctx"])
        t = _ref_layer_norm(x, lp["ln_ffn"]) if layer_norm_first else x
        x = x + _ref_ffn(t, lp["ffn"])
        if not layer_norm_first:
            x = _ref_layer_norm(x, lp["ln_ffn"])
    if layer_norm_first:
        x = _ref_layer_norm(x, params["ln_final"])
    return x


# ---------------------------------------------------------------------------
# demo
# ---------------------------------------------------------------------------
if __name__ == "__main__":
    B, TGT_LEN, SRC_LEN = 2, 8, 8
    # d_model is a multiple of 128 so every kernel output is lane-dense.
    D_MODEL, D_INNER, N_HEAD, N_LAYERS, VOCAB = 128, 256, 4, 2, 64

    root = jax.random.PRNGKey(0)
    kp, kt, ke = jax.random.split(root, 3)

    params = init_params(kp, vocab=VOCAB, d_model=D_MODEL, d_inner=D_INNER,
                         n_head=N_HEAD, n_layers=N_LAYERS)
    prepared = prepare_params(params)          # one-time weight layout prep

    tgt_seq = jax.random.randint(kt, (B, TGT_LEN), 1, VOCAB, dtype=jnp.int32)
    tgt_seq = tgt_seq.at[1, -2:].set(PAD)                 # some target padding
    enc_output = jax.random.normal(ke, (B, SRC_LEN, D_MODEL), dtype=jnp.float32)
    enc_mask = jnp.zeros((B, SRC_LEN), dtype=bool).at[1, -3:].set(True)

    for lnf in (True, False):
        out = decoder_forward(tgt_seq, enc_output, enc_mask, prepared,
                              layer_norm_first=lnf)
        out = jax.block_until_ready(out)
        ref = reference_decoder(tgt_seq, enc_output, enc_mask, params,
                                layer_norm_first=lnf)
        ref = jax.block_until_ready(ref)
        assert out.shape == (B, TGT_LEN, D_MODEL)
        assert bool(jnp.all(jnp.isfinite(out)))
        max_diff = float(jnp.max(jnp.abs(out - ref)))
        assert bool(jnp.allclose(out, ref, atol=2e-2, rtol=2e-2)), (
            f"layer_norm_first={lnf}: max abs diff {max_diff}")

    print("KERNEL_OK")
</pallas_src>

<mosaic_0001>
module attributes {stable_mosaic.version = 11 : i64} {
  func.func @_proj_kernel(%arg0: i32, %arg1: memref<16x128xf32, #tpu.memory_space<vmem>>, %arg2: memref<2x128xf32, #tpu.memory_space<vmem>>, %arg3: memref<128x384xf32, #tpu.memory_space<vmem>>, %arg4: memref<1x384xf32, #tpu.memory_space<vmem>>, %arg5: memref<16x128xf32, #tpu.memory_space<vmem>>, %arg6: memref<16x128xf32, #tpu.memory_space<vmem>>, %arg7: memref<16x128xf32, #tpu.memory_space<vmem>>) attributes {dimension_semantics = [#tpu.dimension_semantics<parallel>], iteration_bounds = array<i64: 1>, scalar_prefetch = 0 : i64, scratch_operands = 0 : i64, tpu.core_type = #tpu.core_type<tc>, window_params = [{transform_indices = @transform_0, window_bounds = array<i64: 16, 128>}, {pipeline_mode = #tpu.pipeline_mode<synchronous>, transform_indices = @transform_1, window_bounds = array<i64: 2, 128>}, {pipeline_mode = #tpu.pipeline_mode<synchronous>, transform_indices = @transform_2, window_bounds = array<i64: 128, 384>}, {pipeline_mode = #tpu.pipeline_mode<synchronous>, transform_indices = @transform_3, window_bounds = array<i64: 1, 384>}, {transform_indices = @transform_4, window_bounds = array<i64: 16, 128>}, {transform_indices = @transform_5, window_bounds = array<i64: 16, 128>}, {transform_indices = @transform_6, window_bounds = array<i64: 16, 128>}]} {
    %c0 = arith.constant 0 : index
    %c0_0 = arith.constant 0 : index
    %0 = vector.load %arg1[%c0, %c0_0] : memref<16x128xf32, #tpu.memory_space<vmem>>, vector<16x128xf32>
    %c0_1 = arith.constant 0 : index
    %c0_2 = arith.constant 0 : index
    %1 = vector.load %arg2[%c0_1, %c0_2] : memref<2x128xf32, #tpu.memory_space<vmem>>, vector<2x128xf32>
    %cst = arith.constant dense<0.000000e+00> : vector<16xf32>
    %2 = vector.multi_reduction <add>, %0, %cst [1] : vector<16x128xf32> to vector<16xf32>
    %3 = vector.shape_cast %2 : vector<16xf32> to vector<16x1xf32>
    %cst_3 = arith.constant 1.280000e+02 : f32
    %4 = vector.broadcast %cst_3 : f32 to vector<16x1xf32>
    %5 = arith.divf %3, %4 : vector<16x1xf32>
    %6 = vector.broadcast %5 : vector<16x1xf32> to vector<16x128xf32>
    %7 = arith.subf %0, %6 : vector<16x128xf32>
    %8 = arith.mulf %7, %7 : vector<16x128xf32>
    %cst_4 = arith.constant dense<0.000000e+00> : vector<16xf32>
    %9 = vector.multi_reduction <add>, %8, %cst_4 [1] : vector<16x128xf32> to vector<16xf32>
    %10 = vector.shape_cast %9 : vector<16xf32> to vector<16x1xf32>
    %cst_5 = arith.constant 1.280000e+02 : f32
    %11 = vector.broadcast %cst_5 : f32 to vector<16x1xf32>
    %12 = arith.divf %10, %11 : vector<16x1xf32>
    %cst_6 = arith.constant 9.99999974E-6 : f32
    %13 = vector.broadcast %cst_6 : f32 to vector<16x1xf32>
    %14 = arith.addf %12, %13 : vector<16x1xf32>
    %15 = math.rsqrt %14 : vector<16x1xf32>
    %16 = vector.extract_strided_slice %1 {offsets = [0, 0], sizes = [1, 128], strides = [1, 1]} : vector<2x128xf32> to vector<1x128xf32>
    %17 = vector.broadcast %15 : vector<16x1xf32> to vector<16x128xf32>
    %18 = vector.broadcast %16 : vector<1x128xf32> to vector<16x128xf32>
    %19 = arith.mulf %17, %18 : vector<16x128xf32>
    %20 = arith.mulf %7, %19 : vector<16x128xf32>
    %21 = vector.extract_strided_slice %1 {offsets = [1, 0], sizes = [1, 128], strides = [1, 1]} : vector<2x128xf32> to vector<1x128xf32>
    %22 = vector.broadcast %21 : vector<1x128xf32> to vector<16x128xf32>
    %23 = arith.addf %20, %22 : vector<16x128xf32>
    %c0_7 = arith.constant 0 : index
    %c0_8 = arith.constant 0 : index
    %24 = vector.load %arg3[%c0_7, %c0_8] : memref<128x384xf32, #tpu.memory_space<vmem>>, vector<128x384xf32>
    %cst_9 = arith.constant dense<0.000000e+00> : vector<16x384xf32>
    %25 = tpu.matmul %23, %24, %cst_9 {dimension_numbers = #tpu.dot_dimension_numbers<[1], [0], [0], [1], [0, 0, 1, 1], [], []>} : vector<16x128xf32>, vector<128x384xf32>, vector<16x384xf32> -> vector<16x384xf32>
    %c0_10 = arith.constant 0 : index
    %c0_11 = arith.constant 0 : index
    %26 = vector.load %arg4[%c0_10, %c0_11] : memref<1x384xf32, #tpu.memory_space<vmem>>, vector<1x384xf32>
    %27 = vector.broadcast %26 : vector<1x384xf32> to vector<16x384xf32>
    %28 = arith.addf %25, %27 : vector<16x384xf32>
    %29 = vector.extract_strided_slice %28 {offsets = [0, 0], sizes = [16, 128], strides = [1, 1]} : vector<16x384xf32> to vector<16x128xf32>
    %c0_12 = arith.constant 0 : index
    %c0_13 = arith.constant 0 : index
    %30 = vector.load %arg5[%c0_12, %c0_13] : memref<16x128xf32, #tpu.memory_space<vmem>>, vector<16x128xf32>
    tpu.vector_store %arg5[%c0_12, %c0_13], %29 {strides = array<i32>} : memref<16x128xf32, #tpu.memory_space<vmem>>, vector<16x128xf32>,
    %31 = vector.extract_strided_slice %28 {offsets = [0, 128], sizes = [16, 128], strides = [1, 1]} : vector<16x384xf32> to vector<16x128xf32>
    %c0_14 = arith.constant 0 : index
    %c0_15 = arith.constant 0 : index
    %32 = vector.load %arg6[%c0_14, %c0_15] : memref<16x128xf32, #tpu.memory_space<vmem>>, vector<16x128xf32>
    tpu.vector_store %arg6[%c0_14, %c0_15], %31 {strides = array<i32>} : memref<16x128xf32, #tpu.memory_space<vmem>>, vector<16x128xf32>,
    %33 = vector.extract_strided_slice %28 {offsets = [0, 256], sizes = [16, 128], strides = [1, 1]} : vector<16x384xf32> to vector<16x128xf32>
    %c0_16 = arith.constant 0 : index
    %c0_17 = arith.constant 0 : index
    %34 = vector.load %arg7[%c0_16, %c0_17] : memref<16x128xf32, #tpu.memory_space<vmem>>, vector<16x128xf32>
    tpu.vector_store %arg7[%c0_16, %c0_17], %33 {strides = array<i32>} : memref<16x128xf32, #tpu.memory_space<vmem>>, vector<16x128xf32>,
    return
  }
  func.func @transform_0(%arg0: i32) -> (i32, i32) {
    %c0_i32 = arith.constant 0 : i32
    %c0_i32_0 = arith.constant 0 : i32
    return %arg0, %c0_i32 : i32, i32
  }
  func.func @transform_1(%arg0: i32) -> (i32, i32) {
    %c0_i32 = arith.constant 0 : i32
    %c0_i32_0 = arith.constant 0 : i32
    %c0_i32_1 = arith.constant 0 : i32
    return %c0_i32, %c0_i32_0 : i32, i32
  }
  func.func @transform_2(%arg0: i32) -> (i32, i32) {
    %c0_i32 = arith.constant 0 : i32
    %c0_i32_0 = arith.constant 0 : i32
    %c0_i32_1 = arith.constant 0 : i32
    return %c0_i32, %c0_i32_0 : i32, i32
  }
  func.func @transform_3(%arg0: i32) -> (i32, i32) {
    %c0_i32 = arith.constant 0 : i32
    %c0_i32_0 = arith.constant 0 : i32
    %c0_i32_1 = arith.constant 0 : i32
    return %c0_i32, %c0_i32_0 : i32, i32
  }
  func.func @transform_4(%arg0: i32) -> (i32, i32) {
    %c0_i32 = arith.constant 0 : i32
    %c0_i32_0 = arith.constant 0 : i32
    return %arg0, %c0_i32 : i32, i32
  }
  func.func @transform_5(%arg0: i32) -> (i32, i32) {
    %c0_i32 = arith.constant 0 : i32
    %c0_i32_0 = arith.constant 0 : i32
    return %arg0, %c0_i32 : i32, i32
  }
  func.func @transform_6(%arg0: i32) -> (i32, i32) {
    %c0_i32 = arith.constant 0 : i32
    %c0_i32_0 = arith.constant 0 : i32
    return %arg0, %c0_i32 : i32, i32
  }
}

</mosaic_0001>

<llo_original>
// kernel: tpu_custom_call.1
$region0: #{tpu_custom_call.1}
  #allocation0 [shape = 'u32[]', space=smem, size = 0x4, offset = 0x4, fixed_abs, tag = 'smem constant byte address 0x4 - core index']
  #allocation1 [shape = 'u32[72,128]{1,0:T(1,128)}', space=vmem, size = 0x9000, scoped, tag = 'internal scratch']
  %s0 = inlined_call_operand.hbm [shape: f32[16,128], index: 0, kind: input, shape index: {}]
  %s1 = inlined_call_operand.hbm [shape: f32[2,128], index: 1, kind: input, shape index: {}]
  %s2 = inlined_call_operand.hbm [shape: f32[128,384], index: 2, kind: input, shape index: {}]
  %s3 = inlined_call_operand.hbm [shape: f32[1,384], index: 3, kind: input, shape index: {}]
  %s4 = inlined_call_operand.hbm [shape: f32[16,128], index: 4, kind: output, shape index: {0}]
  %s5 = inlined_call_operand.hbm [shape: f32[16,128], index: 5, kind: output, shape index: {1}]
  %s6 = inlined_call_operand.hbm [shape: f32[16,128], index: 6, kind: output, shape index: {2}]
  %7 = xla_tuple %s4, %s5, %s6
  %s8 = sld [smem:[#allocation0]]
  $region58: #{tpu_custom_call.1} parent=0
    _
  %s10 = ssub.s32 1, %s8
  %s11 = scalar_select 0, %s10, %s8
  $region1: #{tpu_custom_call.1} parent=0
    #allocation2 [shape = 'u8[8192]{0}', space=vmem, size = 0x2000, scoped, tag = 'input window, operand 0, single buffered']
    #allocation3 [shape = 's32[1]{0}', space=sflag, size = 0x4, scoped, tag = 'scoped memory for tpu_custom_call.1']
    #allocation4 [shape = 's32[1]{0}', space=sflag, size = 0x4, scoped, tag = 'scoped memory for tpu_custom_call.1']
    #allocation5 [shape = 'u8[1024]{0}', space=vmem, size = 0x400, scoped, tag = 'input window, operand 1, single buffered']
    #allocation6 [shape = 's32[1]{0}', space=sflag, size = 0x4, scoped, tag = 'scoped memory for tpu_custom_call.1']
    #allocation7 [shape = 'u8[196608]{0}', space=vmem, size = 0x30000, scoped, tag = 'input window, operand 2, single buffered']
    #allocation8 [shape = 'u8[1536]{0}', space=vmem, size = 0x800, scoped, tag = 'input window, operand 3, single buffered']
    #allocation9 [shape = 's32[1]{0}', space=sflag, size = 0x4, scoped, tag = 'scoped memory for tpu_custom_call.1']
    #allocation10 [shape = 'u8[8192]{0}', space=vmem, size = 0x2000, scoped, tag = 'output window, operand 0, single buffered']
    #allocation11 [shape = 'u8[8192]{0}', space=vmem, size = 0x2000, scoped, tag = 'output window, operand 1, single buffered']
    #allocation12 [shape = 's32[1]{0}', space=sflag, size = 0x4, scoped, tag = 'scoped memory for tpu_custom_call.1']
    #allocation13 [shape = 'u8[8192]{0}', space=vmem, size = 0x2000, scoped, tag = 'output window, operand 2, single buffered']
    %12 = vsyncpa [#allocation3], 0
    %13 = vsyncpa [#allocation6], 0
    %14 = vsyncpa [#allocation9], 0
    %15 = vsyncpa [#allocation4], 0
    %16 = vsyncpa [#allocation12], 0
    // Predicated region
    $region2: #{tpu_custom_call.1} parent=1 // pred_check
      _
    $region3: #{tpu_custom_call.1} parent=1 // pred_check_branch
      %18 = sbr.rel (0) target = $region5
    $region4: #{tpu_custom_call.1} parent=1 // pred_region
      %20 = vsyncadd [#allocation3], 0
      %s21 = sshll.u32 %s0, 4
      %s22 = int_to_ptr.hbm [resolvable:$true] %s21
      %s23 = sshll.u32 [#allocation2], 4
      %s24 = int_to_ptr.vmem [resolvable:$true] %s23
      %29 = dma.hbm_to_vmem [thread:$0]  %s22, 256, %s24, [#allocation3], 128, 128, 8
    $region5: #{tpu_custom_call.1} parent=1 // pred_fallthru
      _
    // Predicated region
    $region6: #{tpu_custom_call.1} parent=1 // pred_check
      _
    $region7: #{tpu_custom_call.1} parent=1 // pred_check_branch
      %31 = sbr.rel (0) target = $region9
    $region8: #{tpu_custom_call.1} parent=1 // pred_region
      %33 = vsyncadd [#allocation6], 0
      %s35 = sshll.u32 %s1, 4
      %s36 = int_to_ptr.hbm [resolvable:$true] %s35
      %s37 = sshll.u32 [#allocation5], 4
      %s38 = int_to_ptr.vmem [resolvable:$true] %s37
      %40 = dma.hbm_to_vmem [thread:$0]  %s36, 32, %s38, [#allocation6]
    $region9: #{tpu_custom_call.1} parent=1 // pred_fallthru
      _
    // Predicated region
    $region10: #{tpu_custom_call.1} parent=1 // pred_check
      _
    $region11: #{tpu_custom_call.1} parent=1 // pred_check_branch
      %42 = sbr.rel (0) target = $region13
    $region12: #{tpu_custom_call.1} parent=1 // pred_region
      %44 = vsyncadd [#allocation6], 0
      %s45 = sshll.u32 %s2, 4
      %s46 = int_to_ptr.hbm [resolvable:$true] %s45
      %s47 = sshll.u32 [#allocation7], 4
      %s48 = int_to_ptr.vmem [resolvable:$true] %s47
      %53 = dma.hbm_to_vmem [thread:$0]  %s46, 6144, %s48, [#allocation6], 384, 384, 24
    $region13: #{tpu_custom_call.1} parent=1 // pred_fallthru
      _
    // Predicated region
    $region14: #{tpu_custom_call.1} parent=1 // pred_check
      _
    $region15: #{tpu_custom_call.1} parent=1 // pred_check_branch
      %55 = sbr.rel (0) target = $region17
    $region16: #{tpu_custom_call.1} parent=1 // pred_region
      %57 = vsyncadd [#allocation9], 0
      %s59 = sshll.u32 %s3, 4
      %s60 = int_to_ptr.hbm [resolvable:$true] %s59
      %s61 = sshll.u32 [#allocation8], 4
      %s62 = int_to_ptr.vmem [resolvable:$true] %s61
      %64 = dma.hbm_to_vmem [thread:$0]  %s60, 48, %s62, [#allocation9]
    $region17: #{tpu_custom_call.1} parent=1 // pred_fallthru
      _
    // Predicated region
    $region18: #{tpu_custom_call.1} parent=1 // pred_check
      _
    $region19: #{tpu_custom_call.1} parent=1 // pred_check_branch
      %66 = sbr.rel (0) target = $region21
    $region20: #{tpu_custom_call.1} parent=1 // pred_region
      %68 = dma.done [#allocation3], 256
    $region21: #{tpu_custom_call.1} parent=1 // pred_fallthru
      _
    // Predicated region
    $region22: #{tpu_custom_call.1} parent=1 // pred_check
      _
    $region23: #{tpu_custom_call.1} parent=1 // pred_check_branch
      %70 = sbr.rel (0) target = $region25
    $region24: #{tpu_custom_call.1} parent=1 // pred_region
      %72 = dma.done [#allocation6], 32
    $region25: #{tpu_custom_call.1} parent=1 // pred_fallthru
      _
    // Predicated region
    $region26: #{tpu_custom_call.1} parent=1 // pred_check
      _
    $region27: #{tpu_custom_call.1} parent=1 // pred_check_branch
      %74 = sbr.rel (0) target = $region29
    $region28: #{tpu_custom_call.1} parent=1 // pred_region
      %76 = dma.done [#allocation6], 6144
    $region29: #{tpu_custom_call.1} parent=1 // pred_fallthru
      _
    // Predicated region
    $region30: #{tpu_custom_call.1} parent=1 // pred_check
      _
    $region31: #{tpu_custom_call.1} parent=1 // pred_check_branch
      %78 = sbr.rel (0) target = $region33
    $region32: #{tpu_custom_call.1} parent=1 // pred_region
      %80 = dma.done [#allocation9], 48
    $region33: #{tpu_custom_call.1} parent=1 // pred_fallthru
      _
    %v81 = vld [vmem:[#allocation2] sm:$0xff]
    %v82 = vld [vmem:[#allocation2 + $0x8] sm:$0xff]
    %v83 = vld [vmem:[#allocation5] sm:$0x3]
    %84 = vadd.xlane.f32.xlu0 %v81
    %v85 = vpop.xlane.xlu0 %84
    %86 = vadd.xlane.f32.xlu0 %v82
    %v87 = vpop.xlane.xlu0 %86
    %v88 = vrcp.pop 128.0
    %v89 = vmul.f32 128.0, %v88
    %v90 = vsub.f32 1.0, %v89
    %v91 = vmul.f32 %v88, %v90
    %v92 = vadd.f32 %v88, %v91
    %vm93 = vweird.f32 %v88
    %v94 = vsel %vm93, %v88, %v92
    %v95 = vmul.f32 %v85, %v94
    %v96 = vmul.f32 %v87, %v94
    %v97 = vsub.f32 %v81, %v95
    %v98 = vsub.f32 %v82, %v96
    %v99 = vmul.f32 %v97, %v97
    %v100 = vmul.f32 %v98, %v98
    %101 = vadd.xlane.f32.xlu0 %v99
    %v102 = vpop.xlane.xlu0 %101
    %103 = vadd.xlane.f32.xlu0 %v100
    %v104 = vpop.xlane.xlu0 %103
    %v105 = vmul.f32 %v102, %v94
    %v106 = vmul.f32 %v104, %v94
    %v107 = vadd.f32 %v105, 1e-05
    %v108 = vadd.f32 %v106, 1e-05
    %v109 = vrsqrt.pop %v107
    %v110 = vmul.f32 %v109, %v107
    %v111 = vmul.f32 %v110, %v109
    %v112 = vmul.f32 0.5, %v111
    %v113 = vsub.f32 1.5, %v112
    %v114 = vmul.f32 %v109, %v113
    %vm115 = vweird.f32 %v107
    %vm116 = vweird.f32 %v109
    %vm117 = vmor %vm115, %vm116
    %v118 = vsel %vm117, %v109, %v114
    %v119 = vrsqrt.pop %v108
    %v120 = vmul.f32 %v119, %v108
    %v121 = vmul.f32 %v120, %v119
    %v122 = vmul.f32 0.5, %v121
    %v123 = vsub.f32 1.5, %v122
    %v124 = vmul.f32 %v119, %v123
    %vm125 = vweird.f32 %v108
    %vm126 = vweird.f32 %v119
    %vm127 = vmor %vm125, %vm126
    %v128 = vsel %vm127, %v119, %v124
    %v129 = vperm.slane %v83, 0
    %v130 = vmul.f32 %v118, %v129
    %v131 = vmul.f32 %v128, %v129
    %v132 = vmul.f32 %v97, %v130
    %v133 = vmul.f32 %v98, %v131
    %v134 = vperm.slane %v83, 1
    %v135 = vadd.f32 %v132, %v134
    %v136 = vadd.f32 %v133, %v134
    %v137 = vld [vmem:[#allocation7] sm:$0xff]
    %v138 = vld [vmem:[#allocation7 + $0x8] sm:$0xff]
    %v139 = vld [vmem:[#allocation7 + $0x10] sm:$0xff]
    %v140 = vld [vmem:[#allocation7 + $0x18] sm:$0xff]
    %v141 = vld [vmem:[#allocation7 + $0x20] sm:$0xff]
    %v142 = vld [vmem:[#allocation7 + $0x28] sm:$0xff]
    %v143 = vld [vmem:[#allocation7 + $0x30] sm:$0xff]
    %v144 = vld [vmem:[#allocation7 + $0x38] sm:$0xff]
    %v145 = vld [vmem:[#allocation7 + $0x40] sm:$0xff]
    %v146 = vld [vmem:[#allocation7 + $0x48] sm:$0xff]
    %v147 = vld [vmem:[#allocation7 + $0x50] sm:$0xff]
    %v148 = vld [vmem:[#allocation7 + $0x58] sm:$0xff]
    %v149 = vld [vmem:[#allocation7 + $0x60] sm:$0xff]
    %v150 = vld [vmem:[#allocation7 + $0x68] sm:$0xff]
    %v151 = vld [vmem:[#allocation7 + $0x70] sm:$0xff]
    %v152 = vld [vmem:[#allocation7 + $0x78] sm:$0xff]
    %v153 = vld [vmem:[#allocation7 + $0x80] sm:$0xff]
    %v154 = vld [vmem:[#allocation7 + $0x88] sm:$0xff]
    %v155 = vld [vmem:[#allocation7 + $0x90] sm:$0xff]
    %v156 = vld [vmem:[#allocation7 + $0x98] sm:$0xff]
    %v157 = vld [vmem:[#allocation7 + $0xa0] sm:$0xff]
    %v158 = vld [vmem:[#allocation7 + $0xa8] sm:$0xff]
    %v159 = vld [vmem:[#allocation7 + $0xb0] sm:$0xff]
    %v160 = vld [vmem:[#allocation7 + $0xb8] sm:$0xff]
    %v161 = vld [vmem:[#allocation7 + $0xc0] sm:$0xff]
    %v162 = vld [vmem:[#allocation7 + $0xc8] sm:$0xff]
    %v163 = vld [vmem:[#allocation7 + $0xd0] sm:$0xff]
    %v164 = vld [vmem:[#allocation7 + $0xd8] sm:$0xff]
    %v165 = vld [vmem:[#allocation7 + $0xe0] sm:$0xff]
    %v166 = vld [vmem:[#allocation7 + $0xe8] sm:$0xff]
    %v167 = vld [vmem:[#allocation7 + $0xf0] sm:$0xff]
    %v168 = vld [vmem:[#allocation7 + $0xf8] sm:$0xff]
    %v169 = vld [vmem:[#allocation7 + $0x100] sm:$0xff]
    %v170 = vld [vmem:[#allocation7 + $0x108] sm:$0xff]
    %v171 = vld [vmem:[#allocation7 + $0x110] sm:$0xff]
    %v172 = vld [vmem:[#allocation7 + $0x118] sm:$0xff]
    %v173 = vld [vmem:[#allocation7 + $0x120] sm:$0xff]
    %v174 = vld [vmem:[#allocation7 + $0x128] sm:$0xff]
    %v175 = vld [vmem:[#allocation7 + $0x130] sm:$0xff]
    %v176 = vld [vmem:[#allocation7 + $0x138] sm:$0xff]
    %v177 = vld [vmem:[#allocation7 + $0x140] sm:$0xff]
    %v178 = vld [vmem:[#allocation7 + $0x148] sm:$0xff]
    %v179 = vld [vmem:[#allocation7 + $0x150] sm:$0xff]
    %v180 = vld [vmem:[#allocation7 + $0x158] sm:$0xff]
    %v181 = vld [vmem:[#allocation7 + $0x160] sm:$0xff]
    %v182 = vld [vmem:[#allocation7 + $0x168] sm:$0xff]
    %v183 = vld [vmem:[#allocation7 + $0x170] sm:$0xff]
    %v184 = vld [vmem:[#allocation7 + $0x178] sm:$0xff]
    %v185 = vld [vmem:[#allocation8] sm:$0x7]
    %v187 = vperm.slane %v185, 0
    %v188 = vperm.slane %v185, 1
    %v189 = vperm.slane %v185, 2
    %193 = vmatpush.msra.mxu0 %v182
    %194 = vmatpush.msra.mxu0 %v179
    %195 = vmatpush.msra.mxu0 %v176
    %196 = vmatpush.msra.mxu0 %v173
    %197 = vmatpush.msra.mxu0 %v170
    %198 = vmatpush.msra.mxu0 %v167
    %199 = vmatpush.msra.mxu0 %v164
    %200 = vmatpush.msra.mxu0 %v161
    %201 = vmatpush.msra.mxu0 %v158
    %202 = vmatpush.msra.mxu0 %v155
    %203 = vmatpush.msra.mxu0 %v152
    %204 = vmatpush.msra.mxu0 %v149
    %205 = vmatpush.msra.mxu0 %v146
    %206 = vmatpush.msra.mxu0 %v143
    %207 = vmatpush.msra.mxu0 %v140
    %208 = vmatpush.msra.mxu0 %v137
    %209 = vmatmul.f32.gmra.mxu0 %v135
    %v210 = vpop.f32.mrf.mxu0
    %v211 = vadd.f32 %v187, %v210
    %212 = vmatmul.f32.gmra.mxu0 %v136
    %v213 = vpop.f32.mrf.mxu0
    %v214 = vadd.f32 %v187, %v213
    %215 = vdwg.mxu0
    %216 = vmatpush.msra.mxu0 %v183
    %217 = vmatpush.msra.mxu0 %v180
    %218 = vmatpush.msra.mxu0 %v177
    %219 = vmatpush.msra.mxu0 %v174
    %220 = vmatpush.msra.mxu0 %v171
    %221 = vmatpush.msra.mxu0 %v168
    %222 = vmatpush.msra.mxu0 %v165
    %223 = vmatpush.msra.mxu0 %v162
    %224 = vmatpush.msra.mxu0 %v159
    %225 = vmatpush.msra.mxu0 %v156
    %226 = vmatpush.msra.mxu0 %v153
    %227 = vmatpush.msra.mxu0 %v150
    %228 = vmatpush.msra.mxu0 %v147
    %229 = vmatpush.msra.mxu0 %v144
    %230 = vmatpush.msra.mxu0 %v141
    %231 = vmatpush.msra.mxu0 %v138
    %232 = vmatmul.f32.gmra.mxu0 %v135
    %v233 = vpop.f32.mrf.mxu0
    %v234 = vadd.f32 %v188, %v233
    %235 = vmatmul.f32.gmra.mxu0 %v136
    %v236 = vpop.f32.mrf.mxu0
    %v237 = vadd.f32 %v188, %v236
    %238 = vdwg.mxu0
    %239 = vmatpush.msra.mxu0 %v184
    %240 = vmatpush.msra.mxu0 %v181
    %241 = vmatpush.msra.mxu0 %v178
    %242 = vmatpush.msra.mxu0 %v175
    %243 = vmatpush.msra.mxu0 %v172
    %244 = vmatpush.msra.mxu0 %v169
    %245 = vmatpush.msra.mxu0 %v166
    %246 = vmatpush.msra.mxu0 %v163
    %247 = vmatpush.msra.mxu0 %v160
    %248 = vmatpush.msra.mxu0 %v157
    %249 = vmatpush.msra.mxu0 %v154
    %250 = vmatpush.msra.mxu0 %v151
    %251 = vmatpush.msra.mxu0 %v148
    %252 = vmatpush.msra.mxu0 %v145
    %253 = vmatpush.msra.mxu0 %v142
    %254 = vmatpush.msra.mxu0 %v139
    %255 = vmatmul.f32.gmra.mxu0 %v135
    %v256 = vpop.f32.mrf.mxu0
    %v257 = vadd.f32 %v189, %v256
    %258 = vmatmul.f32.gmra.mxu0 %v136
    %v259 = vpop.f32.mrf.mxu0
    %v260 = vadd.f32 %v189, %v259
    %261 = vdwg.mxu0
    %262 = vst [vmem:[#allocation10] sm:$0xff] %v211
    %263 = vst [vmem:[#allocation10 + $0x8] sm:$0xff] %v214
    %264 = vst [vmem:[#allocation11] sm:$0xff] %v234
    %265 = vst [vmem:[#allocation11 + $0x8] sm:$0xff] %v237
    %266 = vst [vmem:[#allocation13] sm:$0xff] %v257
    %267 = vst [vmem:[#allocation13 + $0x8] sm:$0xff] %v260
    // Predicated region
    $region34: #{tpu_custom_call.1} parent=1 // pred_check
      _
    $region35: #{tpu_custom_call.1} parent=1 // pred_check_branch
      %269 = sbr.rel (0) target = $region37
    $region36: #{tpu_custom_call.1} parent=1 // pred_region
      %271 = vsyncadd [#allocation4], 0
      %s272 = sshll.u32 [#allocation10], 4
      %s273 = int_to_ptr.vmem [resolvable:$true] %s272
      %s274 = sshll.u32 %s4, 4
      %s275 = int_to_ptr.hbm [resolvable:$true] %s274
      %280 = dma.vmem_to_hbm [thread:$0]  %s273, 256, %s275, [#allocation4], 128, 128, 8
    $region37: #{tpu_custom_call.1} parent=1 // pred_fallthru
      _
    // Predicated region
    $region38: #{tpu_custom_call.1} parent=1 // pred_check
      _
    $region39: #{tpu_custom_call.1} parent=1 // pred_check_branch
      %282 = sbr.rel (0) target = $region41
    $region40: #{tpu_custom_call.1} parent=1 // pred_region
      %284 = vsyncadd [#allocation12], 0
      %s285 = sshll.u32 [#allocation11], 4
      %s286 = int_to_ptr.vmem [resolvable:$true] %s285
      %s287 = sshll.u32 %s5, 4
      %s288 = int_to_ptr.hbm [resolvable:$true] %s287
      %293 = dma.vmem_to_hbm [thread:$0]  %s286, 256, %s288, [#allocation12], 128, 128, 8
    $region41: #{tpu_custom_call.1} parent=1 // pred_fallthru
      _
    // Predicated region
    $region42: #{tpu_custom_call.1} parent=1 // pred_check
      _
    $region43: #{tpu_custom_call.1} parent=1 // pred_check_branch
      %295 = sbr.rel (0) target = $region45
    $region44: #{tpu_custom_call.1} parent=1 // pred_region
      %297 = vsyncadd [#allocation12], 0
      %s298 = sshll.u32 [#allocation13], 4
      %s299 = int_to_ptr.vmem [resolvable:$true] %s298
      %s300 = sshll.u32 %s6, 4
      %s301 = int_to_ptr.hbm [resolvable:$true] %s300
      %306 = dma.vmem_to_hbm [thread:$0]  %s299, 256, %s301, [#allocation12], 128, 128, 8
    $region45: #{tpu_custom_call.1} parent=1 // pred_fallthru
      _
    // Predicated region
    $region46: #{tpu_custom_call.1} parent=1 // pred_check
      _
    $region47: #{tpu_custom_call.1} parent=1 // pred_check_branch
      %308 = sbr.rel (0) target = $region49
    $region48: #{tpu_custom_call.1} parent=1 // pred_region
      %310 = dma.done [#allocation4], 256
    $region49: #{tpu_custom_call.1} parent=1 // pred_fallthru
      _
    // Predicated region
    $region50: #{tpu_custom_call.1} parent=1 // pred_check
      _
    $region51: #{tpu_custom_call.1} parent=1 // pred_check_branch
      %312 = sbr.rel (0) target = $region53
    $region52: #{tpu_custom_call.1} parent=1 // pred_region
      %314 = dma.done [#allocation12], 256
    $region53: #{tpu_custom_call.1} parent=1 // pred_fallthru
      _
    // Predicated region
    $region54: #{tpu_custom_call.1} parent=1 // pred_check
      _
    $region55: #{tpu_custom_call.1} parent=1 // pred_check_branch
      %316 = sbr.rel (0) target = $region57
    $region56: #{tpu_custom_call.1} parent=1 // pred_region
      %318 = dma.done [#allocation12], 256
    $region57: #{tpu_custom_call.1} parent=1 // pred_fallthru
      _
    %319 = vsyncpa [#allocation3], 1
    %320 = vsyncpa [#allocation6], 1
    %321 = vsyncpa [#allocation9], 1
    %322 = vsyncpa [#allocation4], 1
    %323 = vsyncpa [#allocation12], 1

</llo_original>
